<compile_context>
chip_gen: v7x
topology: tpu7x:2x2x1
jax: 0.10.0
libtpu: 0.0.40
codegen_flags: <defaults>
</compile_context>

<pallas_src>
import functools

import jax
import jax.numpy as jnp
from jax.experimental import pallas as pl
from jax.experimental.pallas import tpu as pltpu

BN_EPS = 1e-5
LEAKY_SLOPE = 0.01   # PyTorch nn.LeakyReLU default
SUBLANE = 8          # f32 sublane granularity; output features padded to this


def _round_up(x, m):
    return ((x + m - 1) // m) * m


# -----------------------------------------------------------------------------
# Kernel: one batch tile per grid step.
# -----------------------------------------------------------------------------
def discriminator_kernel(x_ref, w1_ref, b1_ref, w2_ref, b2_ref,
                         w3_ref, b3_ref, o_ref):
    # Cast to bf16 inside the kernel (no wrapper-side cast pass over HBM);
    # f32 accumulation on the MXU.
    x = x_ref[...].astype(jnp.bfloat16)
    h = jnp.dot(x, w1_ref[...], preferred_element_type=jnp.float32) + b1_ref[...]
    h = jnp.where(h >= 0, h, LEAKY_SLOPE * h)          # Dropout == identity (eval)

    h = jnp.dot(h.astype(jnp.bfloat16), w2_ref[...],
                preferred_element_type=jnp.float32) + b2_ref[...]
    h = jnp.where(h >= 0, h, LEAKY_SLOPE * h)          # Dropout == identity (eval)

    out = jnp.dot(h.astype(jnp.bfloat16), w3_ref[...],
                  preferred_element_type=jnp.float32) + b3_ref[...]
    # sigmoid = 1 / (1 + exp(-x)); reciprocal routed to the EUP slot.
    o_ref[...] = pl.reciprocal(1.0 + jnp.exp(-out), approx=True).astype(o_ref.dtype)


# -----------------------------------------------------------------------------
# Trace-time parameter preparation: fold eval-mode BN into the Linear layers,
# pad the output layer to a sublane-aligned (8-wide) feature dim, cast to bf16.
# -----------------------------------------------------------------------------
def _fold_params(params):
    s1 = params["g1"] * jax.lax.rsqrt(params["v1"] + BN_EPS)          # (1, H)
    w1 = (params["w1"] * s1).astype(jnp.bfloat16)                     # (in, H)
    b1 = ((params["b1"] - params["m1"]) * s1 + params["be1"]).astype(jnp.float32)

    s2 = params["g2"] * jax.lax.rsqrt(params["v2"] + BN_EPS)
    w2 = (params["w2"] * s2).astype(jnp.bfloat16)
    b2 = ((params["b2"] - params["m2"]) * s2 + params["be2"]).astype(jnp.float32)

    out_dims = params["w3"].shape[1]
    n_pad = _round_up(out_dims, SUBLANE)   # minimal legal pad (block == full dim)
    w3 = jnp.zeros((params["w3"].shape[0], n_pad), jnp.float32)
    w3 = w3.at[:, :out_dims].set(params["w3"]).astype(jnp.bfloat16)
    b3 = jnp.zeros((1, n_pad), jnp.float32).at[:, :out_dims].set(params["b3"])
    return w1, b1, w2, b2, w3, b3


@functools.partial(jax.jit, static_argnames=("tm",))
def discriminator_forward(x, params, *, tm=2048):
    """x: (B, input_dims) float32. params: dict of weights (see init_params).

    tm: max batch-tile rows per grid step (rounded to a multiple of 8).  Large
    tiles amortize per-step pipeline overhead; the tile is also capped so the
    grid has >= 2 steps when B allows (megacore sharding on v7x).  At these
    feature sizes tm=2048 keeps double-buffered tiles ~1 MiB; re-derive tm /
    set vmem_limit_bytes only if input_dims grows into the thousands
    (especially against v7x's 64 MiB physical VMEM).
    """
    b, in_dims = x.shape
    out_dims = params["w3"].shape[1]

    w1, b1, w2, b2, w3, b3 = _fold_params(params)
    n_pad = w3.shape[1]

    # Batch-tile selection (all Python-int math at trace time):
    #   * tile rows multiple of 8 (sublane) unless the whole batch is smaller;
    #   * no full-array jnp.pad: grid = cdiv and the ragged last tile is
    #     masked by Pallas (rows are independent, so garbage rows from the
    #     out-of-bounds remainder never contaminate valid rows and their
    #     writes are discarded);
    #   * keep >= 2 grid steps when possible so v7x's two TensorCores both
    #     get work via dimension_semantics=("parallel",).
    b8 = _round_up(b, SUBLANE)
    tm_eff = min(_round_up(tm, SUBLANE), b8)
    if b8 >= 2 * SUBLANE:
        tm_eff = min(tm_eff, _round_up(pl.cdiv(b8, 2), SUBLANE))
    grid = (pl.cdiv(b, tm_eff),)

    const = lambda i: (0, 0)   # weights/biases: block index never changes

    out = pl.pallas_call(
        discriminator_kernel,
        out_shape=jax.ShapeDtypeStruct((b, n_pad), jnp.float32),
        grid=grid,
        in_specs=[
            pl.BlockSpec((tm_eff, in_dims), lambda i: (i, 0)),
            pl.BlockSpec(w1.shape, const),
            pl.BlockSpec(b1.shape, const),
            pl.BlockSpec(w2.shape, const),
            pl.BlockSpec(b2.shape, const),
            pl.BlockSpec(w3.shape, const),
            pl.BlockSpec(b3.shape, const),
        ],
        out_specs=pl.BlockSpec((tm_eff, n_pad), lambda i: (i, 0)),
        compiler_params=pltpu.CompilerParams(
            dimension_semantics=("parallel",)),
    )(x, w1, b1, w2, b2, w3, b3)

    return out[:, :out_dims]


# -----------------------------------------------------------------------------
# Parameter init (matches the nn.Module shapes; Linear weights stored (in, out),
# BN per-feature vectors stored as (1, D) rows).
# -----------------------------------------------------------------------------
def init_params(key, input_dims, hidden_dims, output_dims):
    ks = jax.random.split(key, 8)

    def lin(k, fan_in, fan_out):
        bound = 1.0 / jnp.sqrt(jnp.float32(fan_in))
        kw, kb = jax.random.split(k)
        w = jax.random.uniform(kw, (fan_in, fan_out), jnp.float32, -bound, bound)
        b = jax.random.uniform(kb, (1, fan_out), jnp.float32, -bound, bound)
        return w, b

    w1, b1 = lin(ks[0], input_dims, hidden_dims)
    w2, b2 = lin(ks[1], hidden_dims, hidden_dims)
    w3, b3 = lin(ks[2], hidden_dims, output_dims)

    def bn(k, d):
        kg, kb, km, kv = jax.random.split(k, 4)
        gamma = 1.0 + 0.1 * jax.random.normal(kg, (1, d), jnp.float32)
        beta = 0.1 * jax.random.normal(kb, (1, d), jnp.float32)
        mean = 0.1 * jax.random.normal(km, (1, d), jnp.float32)
        var = jax.random.uniform(kv, (1, d), jnp.float32, 0.5, 1.5)
        return gamma, beta, mean, var

    g1, be1, m1, v1 = bn(ks[3], hidden_dims)
    g2, be2, m2, v2 = bn(ks[4], hidden_dims)

    return dict(
        w1=w1, b1=b1, g1=g1, be1=be1, m1=m1, v1=v1,
        w2=w2, b2=b2, g2=g2, be2=be2, m2=m2, v2=v2,
        w3=w3, b3=b3,
    )


# -----------------------------------------------------------------------------
# References for validation.
# -----------------------------------------------------------------------------
def reference_forward_f32(x, p):
    """Plain-JAX f32 eval-mode reference (unfolded BN, exact sigmoid)."""
    h = x @ p["w1"] + p["b1"]
    h = (h - p["m1"]) / jnp.sqrt(p["v1"] + BN_EPS) * p["g1"] + p["be1"]
    h = jnp.where(h >= 0, h, LEAKY_SLOPE * h)
    h = h @ p["w2"] + p["b2"]
    h = (h - p["m2"]) / jnp.sqrt(p["v2"] + BN_EPS) * p["g2"] + p["be2"]
    h = jnp.where(h >= 0, h, LEAKY_SLOPE * h)
    out = h @ p["w3"] + p["b3"]
    return jax.nn.sigmoid(out)


def reference_forward_bf16(x, params):
    """Reference mirroring the kernel's BN-folding and bf16 casts (tight check)."""
    w1, b1, w2, b2, w3, b3 = _fold_params(params)
    out_dims = params["w3"].shape[1]
    h = jnp.dot(x.astype(jnp.bfloat16), w1, preferred_element_type=jnp.float32) + b1
    h = jnp.where(h >= 0, h, LEAKY_SLOPE * h)
    h = jnp.dot(h.astype(jnp.bfloat16), w2, preferred_element_type=jnp.float32) + b2
    h = jnp.where(h >= 0, h, LEAKY_SLOPE * h)
    out = jnp.dot(h.astype(jnp.bfloat16), w3, preferred_element_type=jnp.float32) + b3
    return jax.nn.sigmoid(out)[:, :out_dims]


if __name__ == "__main__":
    input_dims, hidden_dims, output_dims = 64, 32, 2

    key = jax.random.PRNGKey(0)
    kx, kp = jax.random.split(key)
    params = init_params(kp, input_dims, hidden_dims, output_dims)

    # batch=8: single tile; batch=20: 2-step grid exercising the ragged
    # (masked) last batch tile.
    for batch in (8, 20):
        kx, ksub = jax.random.split(kx)
        x = jax.random.normal(ksub, (batch, input_dims), jnp.float32)

        out = jax.block_until_ready(discriminator_forward(x, params))
        assert out.shape == (batch, output_dims)

        ref_tight = reference_forward_bf16(x, params)
        assert jnp.allclose(out, ref_tight, atol=5e-3, rtol=5e-3), \
            f"mismatch vs bf16-mirrored reference (batch={batch})"

        ref_f32 = reference_forward_f32(x, params)
        assert jnp.allclose(out, ref_f32, atol=5e-2, rtol=5e-2), \
            f"mismatch vs f32 eval-mode reference (batch={batch})"

    print("KERNEL_OK")
</pallas_src>

<mosaic_0001>
module attributes {stable_mosaic.version = 11 : i64} {
  func.func @discriminator_kernel(%arg0: i32, %arg1: memref<8x64xf32, #tpu.memory_space<vmem>>, %arg2: memref<64x32xbf16, #tpu.memory_space<vmem>>, %arg3: memref<1x32xf32, #tpu.memory_space<vmem>>, %arg4: memref<32x32xbf16, #tpu.memory_space<vmem>>, %arg5: memref<1x32xf32, #tpu.memory_space<vmem>>, %arg6: memref<32x8xbf16, #tpu.memory_space<vmem>>, %arg7: memref<1x8xf32, #tpu.memory_space<vmem>>, %arg8: memref<8x8xf32, #tpu.memory_space<vmem>>) attributes {dimension_semantics = [#tpu.dimension_semantics<parallel>], iteration_bounds = array<i64: 1>, scalar_prefetch = 0 : i64, scratch_operands = 0 : i64, tpu.core_type = #tpu.core_type<tc>, window_params = [{transform_indices = @transform_0, window_bounds = array<i64: 8, 64>}, {pipeline_mode = #tpu.pipeline_mode<synchronous>, transform_indices = @transform_1, window_bounds = array<i64: 64, 32>}, {pipeline_mode = #tpu.pipeline_mode<synchronous>, transform_indices = @transform_2, window_bounds = array<i64: 1, 32>}, {pipeline_mode = #tpu.pipeline_mode<synchronous>, transform_indices = @transform_3, window_bounds = array<i64: 32, 32>}, {pipeline_mode = #tpu.pipeline_mode<synchronous>, transform_indices = @transform_4, window_bounds = array<i64: 1, 32>}, {pipeline_mode = #tpu.pipeline_mode<synchronous>, transform_indices = @transform_5, window_bounds = array<i64: 32, 8>}, {pipeline_mode = #tpu.pipeline_mode<synchronous>, transform_indices = @transform_6, window_bounds = array<i64: 1, 8>}, {transform_indices = @transform_7, window_bounds = array<i64: 8, 8>}]} {
    %c0 = arith.constant 0 : index
    %c0_0 = arith.constant 0 : index
    %0 = vector.load %arg1[%c0, %c0_0] : memref<8x64xf32, #tpu.memory_space<vmem>>, vector<8x64xf32>
    %1 = arith.truncf %0 : vector<8x64xf32> to vector<8x64xbf16>
    %c0_1 = arith.constant 0 : index
    %c0_2 = arith.constant 0 : index
    %2 = vector.load %arg2[%c0_1, %c0_2] : memref<64x32xbf16, #tpu.memory_space<vmem>>, vector<64x32xbf16>
    %cst = arith.constant dense<0.000000e+00> : vector<8x32xf32>
    %3 = tpu.matmul %1, %2, %cst {dimension_numbers = #tpu.dot_dimension_numbers<[1], [0], [0], [1], [0, 0, 1, 1], [], []>} : vector<8x64xbf16>, vector<64x32xbf16>, vector<8x32xf32> -> vector<8x32xf32>
    %c0_3 = arith.constant 0 : index
    %c0_4 = arith.constant 0 : index
    %4 = vector.load %arg3[%c0_3, %c0_4] : memref<1x32xf32, #tpu.memory_space<vmem>>, vector<1x32xf32>
    %5 = vector.broadcast %4 : vector<1x32xf32> to vector<8x32xf32>
    %6 = arith.addf %3, %5 : vector<8x32xf32>
    %cst_5 = arith.constant 0.000000e+00 : f32
    %7 = vector.broadcast %cst_5 : f32 to vector<8x32xf32>
    %8 = arith.cmpf oge, %6, %7 : vector<8x32xf32>
    %cst_6 = arith.constant 0.00999999977 : f32
    %9 = vector.broadcast %cst_6 : f32 to vector<8x32xf32>
    %10 = arith.mulf %9, %6 : vector<8x32xf32>
    %11 = arith.select %8, %6, %10 : vector<8x32xi1>, vector<8x32xf32>
    %12 = arith.truncf %11 : vector<8x32xf32> to vector<8x32xbf16>
    %c0_7 = arith.constant 0 : index
    %c0_8 = arith.constant 0 : index
    %13 = vector.load %arg4[%c0_7, %c0_8] : memref<32x32xbf16, #tpu.memory_space<vmem>>, vector<32x32xbf16>
    %cst_9 = arith.constant dense<0.000000e+00> : vector<8x32xf32>
    %14 = tpu.matmul %12, %13, %cst_9 {dimension_numbers = #tpu.dot_dimension_numbers<[1], [0], [0], [1], [0, 0, 1, 1], [], []>} : vector<8x32xbf16>, vector<32x32xbf16>, vector<8x32xf32> -> vector<8x32xf32>
    %c0_10 = arith.constant 0 : index
    %c0_11 = arith.constant 0 : index
    %15 = vector.load %arg5[%c0_10, %c0_11] : memref<1x32xf32, #tpu.memory_space<vmem>>, vector<1x32xf32>
    %16 = vector.broadcast %15 : vector<1x32xf32> to vector<8x32xf32>
    %17 = arith.addf %14, %16 : vector<8x32xf32>
    %cst_12 = arith.constant 0.000000e+00 : f32
    %18 = vector.broadcast %cst_12 : f32 to vector<8x32xf32>
    %19 = arith.cmpf oge, %17, %18 : vector<8x32xf32>
    %cst_13 = arith.constant 0.00999999977 : f32
    %20 = vector.broadcast %cst_13 : f32 to vector<8x32xf32>
    %21 = arith.mulf %20, %17 : vector<8x32xf32>
    %22 = arith.select %19, %17, %21 : vector<8x32xi1>, vector<8x32xf32>
    %23 = arith.truncf %22 : vector<8x32xf32> to vector<8x32xbf16>
    %c0_14 = arith.constant 0 : index
    %c0_15 = arith.constant 0 : index
    %24 = vector.load %arg6[%c0_14, %c0_15] : memref<32x8xbf16, #tpu.memory_space<vmem>>, vector<32x8xbf16>
    %cst_16 = arith.constant dense<0.000000e+00> : vector<8x8xf32>
    %25 = tpu.matmul %23, %24, %cst_16 {dimension_numbers = #tpu.dot_dimension_numbers<[1], [0], [0], [1], [0, 0, 1, 1], [], []>} : vector<8x32xbf16>, vector<32x8xbf16>, vector<8x8xf32> -> vector<8x8xf32>
    %c0_17 = arith.constant 0 : index
    %c0_18 = arith.constant 0 : index
    %26 = vector.load %arg7[%c0_17, %c0_18] : memref<1x8xf32, #tpu.memory_space<vmem>>, vector<1x8xf32>
    %27 = vector.broadcast %26 : vector<1x8xf32> to vector<8x8xf32>
    %28 = arith.addf %25, %27 : vector<8x8xf32>
    %cst_19 = arith.constant 0.000000e+00 : f32
    %29 = vector.broadcast %cst_19 : f32 to vector<8x8xf32>
    %30 = arith.subf %29, %28 : vector<8x8xf32>
    %31 = math.exp %30 : vector<8x8xf32>
    %cst_20 = arith.constant 1.000000e+00 : f32
    %32 = vector.broadcast %cst_20 : f32 to vector<8x8xf32>
    %33 = arith.addf %32, %31 : vector<8x8xf32>
    %34 = tpu.reciprocal %33 {approx = true} : vector<8x8xf32> -> vector<8x8xf32>
    %c0_21 = arith.constant 0 : index
    %c0_22 = arith.constant 0 : index
    %35 = vector.load %arg8[%c0_21, %c0_22] : memref<8x8xf32, #tpu.memory_space<vmem>>, vector<8x8xf32>
    tpu.vector_store %arg8[%c0_21, %c0_22], %34 {strides = array<i32>} : memref<8x8xf32, #tpu.memory_space<vmem>>, vector<8x8xf32>,
    return
  }
  func.func @transform_0(%arg0: i32) -> (i32, i32) {
    %c0_i32 = arith.constant 0 : i32
    %c0_i32_0 = arith.constant 0 : i32
    return %arg0, %c0_i32 : i32, i32
  }
  func.func @transform_1(%arg0: i32) -> (i32, i32) {
    %c0_i32 = arith.constant 0 : i32
    %c0_i32_0 = arith.constant 0 : i32
    %c0_i32_1 = arith.constant 0 : i32
    return %c0_i32, %c0_i32_0 : i32, i32
  }
  func.func @transform_2(%arg0: i32) -> (i32, i32) {
    %c0_i32 = arith.constant 0 : i32
    %c0_i32_0 = arith.constant 0 : i32
    %c0_i32_1 = arith.constant 0 : i32
    return %c0_i32, %c0_i32_0 : i32, i32
  }
  func.func @transform_3(%arg0: i32) -> (i32, i32) {
    %c0_i32 = arith.constant 0 : i32
    %c0_i32_0 = arith.constant 0 : i32
    %c0_i32_1 = arith.constant 0 : i32
    return %c0_i32, %c0_i32_0 : i32, i32
  }
  func.func @transform_4(%arg0: i32) -> (i32, i32) {
    %c0_i32 = arith.constant 0 : i32
    %c0_i32_0 = arith.constant 0 : i32
    %c0_i32_1 = arith.constant 0 : i32
    return %c0_i32, %c0_i32_0 : i32, i32
  }
  func.func @transform_5(%arg0: i32) -> (i32, i32) {
    %c0_i32 = arith.constant 0 : i32
    %c0_i32_0 = arith.constant 0 : i32
    %c0_i32_1 = arith.constant 0 : i32
    return %c0_i32, %c0_i32_0 : i32, i32
  }
  func.func @transform_6(%arg0: i32) -> (i32, i32) {
    %c0_i32 = arith.constant 0 : i32
    %c0_i32_0 = arith.constant 0 : i32
    %c0_i32_1 = arith.constant 0 : i32
    return %c0_i32, %c0_i32_0 : i32, i32
  }
  func.func @transform_7(%arg0: i32) -> (i32, i32) {
    %c0_i32 = arith.constant 0 : i32
    %c0_i32_0 = arith.constant 0 : i32
    return %arg0, %c0_i32 : i32, i32
  }
}

</mosaic_0001>

<llo_original>
// kernel: discriminator_forward.1
$region0: #{discriminator_forward.1}
  #allocation0 [shape = 'u32[]', space=smem, size = 0x4, offset = 0x4, fixed_abs, tag = 'smem constant byte address 0x4 - core index']
  #allocation1 [shape = 'u32[144,128]{1,0:T(1,128)}', space=vmem, size = 0x12000, scoped, tag = 'internal scratch']
  %s0 = inlined_call_operand.vmem [shape: f32[8,64], index: 0, kind: input, shape index: {}]
  %s1 = inlined_call_operand.vmem [shape: bf16[64,32], index: 1, kind: input, shape index: {}]
  %s2 = inlined_call_operand.vmem [shape: f32[1,32], index: 2, kind: input, shape index: {}]
  %s3 = inlined_call_operand.vmem [shape: bf16[32,32], index: 3, kind: input, shape index: {}]
  %s4 = inlined_call_operand.vmem [shape: f32[1,32], index: 4, kind: input, shape index: {}]
  %s5 = inlined_call_operand.vmem [shape: bf16[32,8], index: 5, kind: input, shape index: {}]
  %s6 = inlined_call_operand.vmem [shape: f32[1,8], index: 6, kind: input, shape index: {}]
  %s7 = inlined_call_operand.vmem [shape: f32[8,8], index: 7, kind: output, shape index: {}]
  %s8 = sld [smem:[#allocation0]]
  $region38: #{discriminator_forward.1} parent=0
    _
  %s10 = ssub.s32 1, %s8
  %s11 = scalar_select 0, %s10, %s8
  // Predicated region
  $region2: #{discriminator_forward.1} parent=0 // pred_check
    _
  $region3: #{discriminator_forward.1} parent=0 // pred_check_branch
    %13 = sbr.rel (0) target = $region5
  $region4: #{discriminator_forward.1} parent=0 // pred_region
    _
  $region5: #{discriminator_forward.1} parent=0 // pred_fallthru
    _
  // Predicated region
  $region6: #{discriminator_forward.1} parent=0 // pred_check
    _
  $region7: #{discriminator_forward.1} parent=0 // pred_check_branch
    %15 = sbr.rel (0) target = $region9
  $region8: #{discriminator_forward.1} parent=0 // pred_region
    _
  $region9: #{discriminator_forward.1} parent=0 // pred_fallthru
    _
  // Predicated region
  $region10: #{discriminator_forward.1} parent=0 // pred_check
    _
  $region11: #{discriminator_forward.1} parent=0 // pred_check_branch
    %17 = sbr.rel (0) target = $region13
  $region12: #{discriminator_forward.1} parent=0 // pred_region
    _
  $region13: #{discriminator_forward.1} parent=0 // pred_fallthru
    _
  // Predicated region
  $region14: #{discriminator_forward.1} parent=0 // pred_check
    _
  $region15: #{discriminator_forward.1} parent=0 // pred_check_branch
    %19 = sbr.rel (0) target = $region17
  $region16: #{discriminator_forward.1} parent=0 // pred_region
    _
  $region17: #{discriminator_forward.1} parent=0 // pred_fallthru
    _
  // Predicated region
  $region18: #{discriminator_forward.1} parent=0 // pred_check
    _
  $region19: #{discriminator_forward.1} parent=0 // pred_check_branch
    %21 = sbr.rel (0) target = $region21
  $region20: #{discriminator_forward.1} parent=0 // pred_region
    _
  $region21: #{discriminator_forward.1} parent=0 // pred_fallthru
    _
  // Predicated region
  $region22: #{discriminator_forward.1} parent=0 // pred_check
    _
  $region23: #{discriminator_forward.1} parent=0 // pred_check_branch
    %23 = sbr.rel (0) target = $region25
  $region24: #{discriminator_forward.1} parent=0 // pred_region
    _
  $region25: #{discriminator_forward.1} parent=0 // pred_fallthru
    _
  // Predicated region
  $region26: #{discriminator_forward.1} parent=0 // pred_check
    _
  $region27: #{discriminator_forward.1} parent=0 // pred_check_branch
    %25 = sbr.rel (0) target = $region29
  $region28: #{discriminator_forward.1} parent=0 // pred_region
    _
  $region29: #{discriminator_forward.1} parent=0 // pred_fallthru
    _
  %v27 = vld [vmem:[%s0] sm:$0xff]
  %v28 = vpack.c.bf16 %v27, %v27
  %v29 = vld [vmem:[%s1] sm:$0xf]
  %v30 = vld [vmem:[%s1 + $0x4] sm:$0xf]
  %v31 = vld [vmem:[%s1 + $0x8] sm:$0xf]
  %v32 = vld [vmem:[%s1 + $0xc] sm:$0xf]
  %v33 = vld [vmem:[%s1 + $0x10] sm:$0xf]
  %v34 = vld [vmem:[%s1 + $0x14] sm:$0xf]
  %v35 = vld [vmem:[%s1 + $0x18] sm:$0xf]
  %v36 = vld [vmem:[%s1 + $0x1c] sm:$0xf]
  %v37 = vld [vmem:[%s2] sm:$0x1]
  %v39 = vlaneseq
  %v40 = vshrl.u32 %v39, 7
  %v41 = vsub.s32 0, %v40
  %v42 = vrot.slane %v37, %v41
  %v52 = vunpack.c.l.b16 %v29
  %v53 = vunpack.c.l.b16 %v30
  %v54 = vunpack.c.l.b16 %v31
  %v55 = vunpack.c.l.b16 %v32
  %v56 = vunpack.c.l.b16 %v33
  %v57 = vunpack.c.l.b16 %v34
  %v58 = vunpack.c.l.b16 %v35
  %v59 = vunpack.c.l.b16 %v36
  %v60 = vpack.c.b16 %v53, %v52
  %v61 = vpack.c.b16 %v55, %v54
  %v62 = vpack.c.b16 %v57, %v56
  %v63 = vpack.c.b16 %v59, %v58
  %vm68 = vcmask 523264
  %v70 = vsel %vm68, %v28, 0
  %72 = vmatprep.subr.bf16.mxu0 0
  %73 = vmatpush1.bf16.msra.mxu0 %v60
  %74 = vmatprep.subr.bf16.mxu0 0
  %75 = vmatpush1.bf16.msra.mxu0 %v61
  %76 = vmatprep.subr.bf16.mxu0 0
  %77 = vmatpush1.bf16.msra.mxu0 %v62
  %78 = vmatprep.subr.bf16.mxu0 0
  %79 = vmatpush1.bf16.msra.mxu0 %v63
  %80 = vmatprep.subr.bf16.mxu0 0
  %81 = vmatpush1.bf16.msra.mxu0 0
  %82 = vmatprep.subr.bf16.mxu0 0
  %83 = vmatpush1.bf16.msra.mxu0 0
  %84 = vmatprep.subr.bf16.mxu0 0
  %85 = vmatpush1.bf16.msra.mxu0 0
  %86 = vmatprep.subr.bf16.mxu0 0
  %87 = vmatpush1.bf16.msra.mxu0 0
  %88 = vmatprep.subr.bf16.mxu0 0
  %89 = vmatpush1.bf16.msra.mxu0 0
  %90 = vmatprep.subr.bf16.mxu0 0
  %91 = vmatpush1.bf16.msra.mxu0 0
  %92 = vmatprep.subr.bf16.mxu0 0
  %93 = vmatpush1.bf16.msra.mxu0 0
  %94 = vmatprep.subr.bf16.mxu0 0
  %95 = vmatpush1.bf16.msra.mxu0 0
  %96 = vmatprep.subr.bf16.mxu0 0
  %97 = vmatpush1.bf16.msra.mxu0 0
  %98 = vmatprep.subr.bf16.mxu0 0
  %99 = vmatpush1.bf16.msra.mxu0 0
  %100 = vmatprep.subr.bf16.mxu0 0
  %101 = vmatpush1.bf16.msra.mxu0 0
  %102 = vmatprep.subr.bf16.mxu0 0
  %103 = vmatpush1.bf16.msra.mxu0 0
  %104 = vmatprep.mubr.bf16.mxu0 0
  %105 = vmatmul.mubr.bf16.gmra.mrb[0].mxu0 %v70
  %v106 = vpop.f32.mrb[0].mxu0
  %v107 = vadd.f32 %v42, %v106
  %v108 = vpop.f32.mrb[0].mxu0
  %v109 = vpop.f32.mrb[0].mxu0
  %v110 = vpop.f32.mrb[0].mxu0
  %111 = vdwg.mxu0
  %vm112 = vcmp.ge.f32.partialorder %v107, 0.0
  %v113 = vmul.f32 %v107, 0.01
  %v114 = vsel %vm112, %v107, %v113
  %v115 = vpack.c.bf16 %v114, %v114
  %v116 = vld [vmem:[%s3] sm:$0xf]
  %v117 = vld [vmem:[%s3 + $0x4] sm:$0xf]
  %v118 = vld [vmem:[%s3 + $0x8] sm:$0xf]
  %v119 = vld [vmem:[%s3 + $0xc] sm:$0xf]
  %v120 = vld [vmem:[%s4] sm:$0x1]
  %v122 = vlaneseq
  %v123 = vshrl.u32 %v122, 7
  %v124 = vsub.s32 0, %v123
  %v125 = vrot.slane %v120, %v124
  %v131 = vunpack.c.l.b16 %v116
  %v132 = vunpack.c.l.b16 %v117
  %v133 = vunpack.c.l.b16 %v118
  %v134 = vunpack.c.l.b16 %v119
  %v135 = vpack.c.b16 %v132, %v131
  %v136 = vpack.c.b16 %v134, %v133
  %vm139 = vcmask 261120
  %v141 = vsel %vm139, %v115, 0
  %143 = vmatprep.subr.bf16.mxu0 0
  %144 = vmatpush1.bf16.msra.mxu0 %v135
  %145 = vmatprep.subr.bf16.mxu0 0
  %146 = vmatpush1.bf16.msra.mxu0 %v136
  %147 = vmatprep.subr.bf16.mxu0 0
  %148 = vmatpush1.bf16.msra.mxu0 0
  %149 = vmatprep.subr.bf16.mxu0 0
  %150 = vmatpush1.bf16.msra.mxu0 0
  %151 = vmatprep.subr.bf16.mxu0 0
  %152 = vmatpush1.bf16.msra.mxu0 0
  %153 = vmatprep.subr.bf16.mxu0 0
  %154 = vmatpush1.bf16.msra.mxu0 0
  %155 = vmatprep.subr.bf16.mxu0 0
  %156 = vmatpush1.bf16.msra.mxu0 0
  %157 = vmatprep.subr.bf16.mxu0 0
  %158 = vmatpush1.bf16.msra.mxu0 0
  %159 = vmatprep.subr.bf16.mxu0 0
  %160 = vmatpush1.bf16.msra.mxu0 0
  %161 = vmatprep.subr.bf16.mxu0 0
  %162 = vmatpush1.bf16.msra.mxu0 0
  %163 = vmatprep.subr.bf16.mxu0 0
  %164 = vmatpush1.bf16.msra.mxu0 0
  %165 = vmatprep.subr.bf16.mxu0 0
  %166 = vmatpush1.bf16.msra.mxu0 0
  %167 = vmatprep.subr.bf16.mxu0 0
  %168 = vmatpush1.bf16.msra.mxu0 0
  %169 = vmatprep.subr.bf16.mxu0 0
  %170 = vmatpush1.bf16.msra.mxu0 0
  %171 = vmatprep.subr.bf16.mxu0 0
  %172 = vmatpush1.bf16.msra.mxu0 0
  %173 = vmatprep.subr.bf16.mxu0 0
  %174 = vmatpush1.bf16.msra.mxu0 0
  %175 = vmatprep.mubr.bf16.mxu0 0
  %176 = vmatmul.mubr.bf16.gmra.mrb[0].mxu0 %v141
  %v177 = vpop.f32.mrb[0].mxu0
  %v178 = vadd.f32 %v125, %v177
  %v179 = vpop.f32.mrb[0].mxu0
  %v180 = vpop.f32.mrb[0].mxu0
  %v181 = vpop.f32.mrb[0].mxu0
  %182 = vdwg.mxu0
  %vm183 = vcmp.ge.f32.partialorder %v178, 0.0
  %v184 = vmul.f32 %v178, 0.01
  %v185 = vsel %vm183, %v178, %v184
  %v186 = vpack.c.bf16 %v185, %v185
  %v187 = vld [vmem:[%s5] sm:$0xf]
  %v188 = vld [vmem:[%s5 + $0x4] sm:$0xf]
  %v189 = vld [vmem:[%s5 + $0x8] sm:$0xf]
  %v190 = vld [vmem:[%s5 + $0xc] sm:$0xf]
  %v191 = vld [vmem:[%s6] sm:$0x1]
  %v193 = vlaneseq
  %v194 = vshrl.u32 %v193, 7
  %v195 = vsub.s32 0, %v194
  %v196 = vrot.slane %v191, %v195
  %v202 = vunpack.c.l.b16 %v187
  %v203 = vunpack.c.l.b16 %v188
  %v204 = vunpack.c.l.b16 %v189
  %v205 = vunpack.c.l.b16 %v190
  %v206 = vpack.c.b16 %v203, %v202
  %v207 = vpack.c.b16 %v205, %v204
  %v211 = vsel %vm139, %v186, 0
  %213 = vmatprep.subr.bf16.mxu0 0
  %214 = vmatpush1.bf16.msra.mxu0 %v206
  %215 = vmatprep.subr.bf16.mxu0 0
  %216 = vmatpush1.bf16.msra.mxu0 %v207
  %217 = vmatprep.subr.bf16.mxu0 0
  %218 = vmatpush1.bf16.msra.mxu0 0
  %219 = vmatprep.subr.bf16.mxu0 0
  %220 = vmatpush1.bf16.msra.mxu0 0
  %221 = vmatprep.subr.bf16.mxu0 0
  %222 = vmatpush1.bf16.msra.mxu0 0
  %223 = vmatprep.subr.bf16.mxu0 0
  %224 = vmatpush1.bf16.msra.mxu0 0
  %225 = vmatprep.subr.bf16.mxu0 0
  %226 = vmatpush1.bf16.msra.mxu0 0
  %227 = vmatprep.subr.bf16.mxu0 0
  %228 = vmatpush1.bf16.msra.mxu0 0
  %229 = vmatprep.subr.bf16.mxu0 0
  %230 = vmatpush1.bf16.msra.mxu0 0
  %231 = vmatprep.subr.bf16.mxu0 0
  %232 = vmatpush1.bf16.msra.mxu0 0
  %233 = vmatprep.subr.bf16.mxu0 0
  %234 = vmatpush1.bf16.msra.mxu0 0
  %235 = vmatprep.subr.bf16.mxu0 0
  %236 = vmatpush1.bf16.msra.mxu0 0
  %237 = vmatprep.subr.bf16.mxu0 0
  %238 = vmatpush1.bf16.msra.mxu0 0
  %239 = vmatprep.subr.bf16.mxu0 0
  %240 = vmatpush1.bf16.msra.mxu0 0
  %241 = vmatprep.subr.bf16.mxu0 0
  %242 = vmatpush1.bf16.msra.mxu0 0
  %243 = vmatprep.subr.bf16.mxu0 0
  %244 = vmatpush1.bf16.msra.mxu0 0
  %245 = vmatprep.mubr.bf16.mxu0 0
  %246 = vmatmul.mubr.bf16.gmra.mrb[0].mxu0 %v211
  %v247 = vpop.f32.mrb[0].mxu0
  %v248 = vadd.f32 %v196, %v247
  %v249 = vpop.f32.mrb[0].mxu0
  %v250 = vpop.f32.mrb[0].mxu0
  %v251 = vpop.f32.mrb[0].mxu0
  %252 = vdwg.mxu0
  %v253 = vsub.f32 0.0, %v248
  %v254 = vmul.f32 %v253, 1.442695
  %v255 = vpow.pop %v254
  %v256 = vadd.f32 %v255, 1.0
  %v257 = vrcp.pop %v256
  %vm258 = vcmask 64512
  %259 = vst.msk [vmem:[%s7] sm:$0xff] %vm258, %v257
  // Predicated region
  $region30: #{discriminator_forward.1} parent=0 // pred_check
    _
  $region31: #{discriminator_forward.1} parent=0 // pred_check_branch
    %261 = sbr.rel (0) target = $region33
  $region32: #{discriminator_forward.1} parent=0 // pred_region
    _
  $region33: #{discriminator_forward.1} parent=0 // pred_fallthru
    _
  // Predicated region
  $region34: #{discriminator_forward.1} parent=0 // pred_check
    _
  $region35: #{discriminator_forward.1} parent=0 // pred_check_branch
    %263 = sbr.rel (0) target = $region37
  $region36: #{discriminator_forward.1} parent=0 // pred_region
    _
  $region37: #{discriminator_forward.1} parent=0 // pred_fallthru
    _

</llo_original>
